<compile_context>
chip_gen: v5e
topology: v5e:2x2
jax: 0.10.0
libtpu: 0.0.40
codegen_flags: <defaults>
</compile_context>

<pallas_src>
import functools

import jax
import jax.numpy as jnp
from jax.experimental import pallas as pl
from jax.experimental.pallas import tpu as pltpu


def patch_embed_kernel(x_ref, w_ref, pos_ref, o_ref):
    # x_ref:   (TM, Ppad)   f32 — TM = TB*N patch rows (TB whole images)
    # w_ref:   (Ppad, Epad) f32 — W^T, zero-padded on K, lane-padded on E
    # pos_ref: (TM, Epad)   f32 — (pos_embedding[1:] + bias) tiled over TB images
    # o_ref:   (TM, Epad)   f32
    o_ref[...] = (
        jnp.dot(
            x_ref[...],
            w_ref[...],
            preferred_element_type=jnp.float32,
            precision=jax.lax.Precision.HIGHEST,
        )
        + pos_ref[...]
    )


def _round_up(x, m):
    return ((x + m - 1) // m) * m


def _pick_tb(B, N):
    """Images per grid step: aim for >=256 MXU rows, keep the block <=1024 rows
    for double-buffering headroom, and keep TB*N 8-row aligned whenever the grid
    has more than one step (the (8,128) BlockSpec rule)."""
    best = None
    for tb in range(1, B + 1):
        if B % tb:
            continue
        tm = tb * N
        if best is not None and tm > 1024:
            break
        if tb != B and tm % 8 != 0:
            continue
        best = tb
        if tm >= 256:
            break
    return best if best is not None else B


@functools.partial(jax.jit, static_argnames=("patch_size",))
def patch_embedding_pallas(x, w, b, cls_token, pos_embedding, *, patch_size):
    """x: (B, C, H, W) NCHW float32. Returns (B, N+1, E)."""
    B, C, H, W = x.shape
    p = patch_size
    hh, ww = H // p, W // p
    N = hh * ww
    P = p * p * C
    E = w.shape[0]                  # torch Linear weight is (E, P)
    Epad = _round_up(E, 128)        # lane-dense output width
    Ppad = _round_up(P, 128)        # lane-dense K for unmasked input loads

    # einops: 'b c (h p1) (w p2) -> b (h w) (p1 p2 c)', flattened to (B*N, P),
    # then zero-padded on K (padding contributes 0 to the dot product).
    patches = (
        x.reshape(B, C, hh, p, ww, p)
        .transpose(0, 2, 4, 3, 5, 1)
        .reshape(B * N, P)
        .astype(jnp.float32)
    )
    patches = jnp.pad(patches, ((0, 0), (0, Ppad - P)))

    # W^T, zero-padded on K and E so the kernel's blocks are (8,128)-aligned.
    w_t = jnp.pad(w.T.astype(jnp.float32), ((0, Ppad - P), (0, Epad - E)))

    pos = pos_embedding.reshape(N + 1, E).astype(jnp.float32)

    TB = _pick_tb(B, N)
    TM = TB * N
    num_blocks = B // TB

    # Fold bias + per-patch positional embedding into one resident table,
    # tiled across the TB images that share a grid step.
    pos_patch = pos[1:] + b.astype(jnp.float32)[None, :]          # (N, E)
    pos_tiled = jnp.pad(jnp.tile(pos_patch, (TB, 1)),
                        ((0, 0), (0, Epad - E)))                   # (TM, Epad)

    out_flat = pl.pallas_call(
        patch_embed_kernel,
        out_shape=jax.ShapeDtypeStruct((B * N, Epad), jnp.float32),
        grid_spec=pltpu.PrefetchScalarGridSpec(
            num_scalar_prefetch=0,
            grid=(num_blocks,),
            in_specs=[
                pl.BlockSpec((TM, Ppad), lambda i: (i, 0)),     # patch rows
                pl.BlockSpec((Ppad, Epad), lambda i: (0, 0)),   # resident weight
                pl.BlockSpec((TM, Epad), lambda i: (0, 0)),     # resident pos+bias
            ],
            out_specs=pl.BlockSpec((TM, Epad), lambda i: (i, 0)),
        ),
        compiler_params=pltpu.CompilerParams(
            dimension_semantics=("parallel",)),
    )(patches, w_t, pos_tiled)

    # Strip lane padding, restore (B, N, E), and prepend the cls row
    # (cls_token + pos[0]) — handled here so the kernel stores stay aligned.
    tok = out_flat[:, :E].reshape(B, N, E)
    cls_row = jnp.broadcast_to(
        cls_token.reshape(1, 1, E) + pos[0][None, None, :], (B, 1, E))
    return jnp.concatenate([cls_row, tok], axis=1)


def patch_embedding_ref(x, w, b, cls_token, pos_embedding, patch_size):
    """Pure-JAX reference matching the PyTorch forward."""
    B, C, H, W = x.shape
    p = patch_size
    hh, ww = H // p, W // p
    N = hh * ww
    P = p * p * C
    patches = (
        x.reshape(B, C, hh, p, ww, p).transpose(0, 2, 4, 3, 5, 1).reshape(B, N, P)
    )
    proj = jnp.matmul(patches, w.T, precision=jax.lax.Precision.HIGHEST) + b
    cls = jnp.broadcast_to(cls_token, (B, 1, w.shape[0]))
    tok = jnp.concatenate([cls, proj], axis=1)            # (B, N+1, E)
    return tok + pos_embedding


if __name__ == "__main__":
    # Module hyperparams (defaults from the PyTorch module)
    image_size, patch_size, in_channels, embed_dim = 28, 7, 1, 64
    num_patches = (image_size // patch_size) ** 2         # 16
    patch_dim = patch_size * patch_size * in_channels     # 49
    batch = 2

    key = jax.random.PRNGKey(0)
    kx, kw, kb, kc, kp = jax.random.split(key, 5)

    # Input (NCHW)
    x = jax.random.normal(kx, (batch, in_channels, image_size, image_size),
                          dtype=jnp.float32)

    # Deterministic parameter init (shapes match nn.Linear / nn.Parameter)
    bound = 1.0 / (patch_dim ** 0.5)
    w = jax.random.uniform(kw, (embed_dim, patch_dim), jnp.float32, -bound, bound)
    b = jax.random.uniform(kb, (embed_dim,), jnp.float32, -bound, bound)
    cls_token = jax.random.normal(kc, (1, 1, embed_dim), dtype=jnp.float32)
    pos_embedding = jax.random.normal(kp, (1, num_patches + 1, embed_dim),
                                      dtype=jnp.float32)

    out = patch_embedding_pallas(x, w, b, cls_token, pos_embedding,
                                 patch_size=patch_size)
    out = jax.block_until_ready(out)

    ref = patch_embedding_ref(x, w, b, cls_token, pos_embedding, patch_size)
    assert out.shape == (batch, num_patches + 1, embed_dim), out.shape
    err = float(jnp.max(jnp.abs(out - ref)))
    assert jnp.allclose(out, ref, atol=1e-4, rtol=1e-4), err

    print("KERNEL_OK")
</pallas_src>

<mosaic_0001>
module attributes {stable_mosaic.version = 11 : i64} {
  func.func @patch_embed_kernel(%arg0: i32, %arg1: memref<32x128xf32, #tpu.memory_space<vmem>>, %arg2: memref<128x128xf32, #tpu.memory_space<vmem>>, %arg3: memref<32x128xf32, #tpu.memory_space<vmem>>, %arg4: memref<32x128xf32, #tpu.memory_space<vmem>>) attributes {dimension_semantics = [#tpu.dimension_semantics<parallel>], iteration_bounds = array<i64: 1>, scalar_prefetch = 0 : i64, scratch_operands = 0 : i64, tpu.core_type = #tpu.core_type<tc>, window_params = [{transform_indices = @transform_0, window_bounds = array<i64: 32, 128>}, {pipeline_mode = #tpu.pipeline_mode<synchronous>, transform_indices = @transform_1, window_bounds = array<i64: 128, 128>}, {pipeline_mode = #tpu.pipeline_mode<synchronous>, transform_indices = @transform_2, window_bounds = array<i64: 32, 128>}, {transform_indices = @transform_3, window_bounds = array<i64: 32, 128>}]} {
    %c0 = arith.constant 0 : index
    %c0_0 = arith.constant 0 : index
    %0 = vector.load %arg1[%c0, %c0_0] : memref<32x128xf32, #tpu.memory_space<vmem>>, vector<32x128xf32>
    %c0_1 = arith.constant 0 : index
    %c0_2 = arith.constant 0 : index
    %1 = vector.load %arg2[%c0_1, %c0_2] : memref<128x128xf32, #tpu.memory_space<vmem>>, vector<128x128xf32>
    %cst = arith.constant dense<0.000000e+00> : vector<32x128xf32>
    %2 = tpu.matmul %0, %1, %cst {dimension_numbers = #tpu.dot_dimension_numbers<[1], [0], [0], [1], [0, 0, 1, 1], [], []>, precision = #tpu.contract_precision<fp32>} : vector<32x128xf32>, vector<128x128xf32>, vector<32x128xf32> -> vector<32x128xf32>
    %c0_3 = arith.constant 0 : index
    %c0_4 = arith.constant 0 : index
    %3 = vector.load %arg3[%c0_3, %c0_4] : memref<32x128xf32, #tpu.memory_space<vmem>>, vector<32x128xf32>
    %4 = arith.addf %2, %3 : vector<32x128xf32>
    %c0_5 = arith.constant 0 : index
    %c0_6 = arith.constant 0 : index
    %5 = vector.load %arg4[%c0_5, %c0_6] : memref<32x128xf32, #tpu.memory_space<vmem>>, vector<32x128xf32>
    tpu.vector_store %arg4[%c0_5, %c0_6], %4 {strides = array<i32>} : memref<32x128xf32, #tpu.memory_space<vmem>>, vector<32x128xf32>,
    return
  }
  func.func @transform_0(%arg0: i32) -> (i32, i32) {
    %c0_i32 = arith.constant 0 : i32
    %c0_i32_0 = arith.constant 0 : i32
    return %arg0, %c0_i32 : i32, i32
  }
  func.func @transform_1(%arg0: i32) -> (i32, i32) {
    %c0_i32 = arith.constant 0 : i32
    %c0_i32_0 = arith.constant 0 : i32
    %c0_i32_1 = arith.constant 0 : i32
    return %c0_i32, %c0_i32_0 : i32, i32
  }
  func.func @transform_2(%arg0: i32) -> (i32, i32) {
    %c0_i32 = arith.constant 0 : i32
    %c0_i32_0 = arith.constant 0 : i32
    %c0_i32_1 = arith.constant 0 : i32
    return %c0_i32, %c0_i32_0 : i32, i32
  }
  func.func @transform_3(%arg0: i32) -> (i32, i32) {
    %c0_i32 = arith.constant 0 : i32
    %c0_i32_0 = arith.constant 0 : i32
    return %arg0, %c0_i32 : i32, i32
  }
}

</mosaic_0001>

<llo_original>
// kernel: patch_embedding_pallas.1
$region0: #{patch_embedding_pallas.1}
  #allocation0 [shape = 'u32[]', space=smem, size = 0x4, offset = 0x4, fixed_abs, tag = 'smem constant byte address 0x4 - core index']
  #allocation1 [shape = 'u32[72,128]{1,0:T(1,128)}', space=vmem, size = 0x9000, scoped, tag = 'internal scratch']
  %s0 = inlined_call_operand.vmem [shape: f32[32,128], index: 0, kind: input, shape index: {}]
  %s1 = inlined_call_operand.vmem [shape: f32[128,128], index: 1, kind: input, shape index: {}]
  %s2 = inlined_call_operand.vmem [shape: f32[32,128], index: 2, kind: input, shape index: {}]
  %s3 = inlined_call_operand.vmem [shape: f32[32,128], index: 3, kind: output, shape index: {}]
  %s4 = sld [smem:[#allocation0]]
  $region22: #{patch_embedding_pallas.1} parent=0
    _
  %s6 = ssub.s32 1, %s4
  %s7 = scalar_select 0, %s6, %s4
  // Predicated region
  $region2: #{patch_embedding_pallas.1} parent=0 // pred_check
    _
  $region3: #{patch_embedding_pallas.1} parent=0 // pred_check_branch
    %9 = sbr.rel (0) target = $region5
  $region4: #{patch_embedding_pallas.1} parent=0 // pred_region
    _
  $region5: #{patch_embedding_pallas.1} parent=0 // pred_fallthru
    _
  // Predicated region
  $region6: #{patch_embedding_pallas.1} parent=0 // pred_check
    _
  $region7: #{patch_embedding_pallas.1} parent=0 // pred_check_branch
    %11 = sbr.rel (0) target = $region9
  $region8: #{patch_embedding_pallas.1} parent=0 // pred_region
    _
  $region9: #{patch_embedding_pallas.1} parent=0 // pred_fallthru
    _
  // Predicated region
  $region10: #{patch_embedding_pallas.1} parent=0 // pred_check
    _
  $region11: #{patch_embedding_pallas.1} parent=0 // pred_check_branch
    %13 = sbr.rel (0) target = $region13
  $region12: #{patch_embedding_pallas.1} parent=0 // pred_region
    _
  $region13: #{patch_embedding_pallas.1} parent=0 // pred_fallthru
    _
  %v14 = vld [vmem:[%s0] sm:$0xff]
  %v15 = vld [vmem:[%s0 + $0x8] sm:$0xff]
  %v16 = vld [vmem:[%s0 + $0x10] sm:$0xff]
  %v17 = vld [vmem:[%s0 + $0x18] sm:$0xff]
  %v18 = vld [vmem:[%s1] sm:$0xff]
  %v19 = vld [vmem:[%s1 + $0x8] sm:$0xff]
  %v20 = vld [vmem:[%s1 + $0x10] sm:$0xff]
  %v21 = vld [vmem:[%s1 + $0x18] sm:$0xff]
  %v22 = vld [vmem:[%s1 + $0x20] sm:$0xff]
  %v23 = vld [vmem:[%s1 + $0x28] sm:$0xff]
  %v24 = vld [vmem:[%s1 + $0x30] sm:$0xff]
  %v25 = vld [vmem:[%s1 + $0x38] sm:$0xff]
  %v26 = vld [vmem:[%s1 + $0x40] sm:$0xff]
  %v27 = vld [vmem:[%s1 + $0x48] sm:$0xff]
  %v28 = vld [vmem:[%s1 + $0x50] sm:$0xff]
  %v29 = vld [vmem:[%s1 + $0x58] sm:$0xff]
  %v30 = vld [vmem:[%s1 + $0x60] sm:$0xff]
  %v31 = vld [vmem:[%s1 + $0x68] sm:$0xff]
  %v32 = vld [vmem:[%s1 + $0x70] sm:$0xff]
  %v33 = vld [vmem:[%s1 + $0x78] sm:$0xff]
  %v34 = vld [vmem:[%s2] sm:$0xff]
  %v35 = vld [vmem:[%s2 + $0x8] sm:$0xff]
  %v36 = vld [vmem:[%s2 + $0x10] sm:$0xff]
  %v37 = vld [vmem:[%s2 + $0x18] sm:$0xff]
  %v38 = vand.u32 %v33, 4294901760
  %39 = vmatpush.msra.mxu0 %v38
  %v40 = vand.u32 %v32, 4294901760
  %41 = vmatpush.msra.mxu0 %v40
  %v42 = vand.u32 %v31, 4294901760
  %43 = vmatpush.msra.mxu0 %v42
  %v44 = vand.u32 %v30, 4294901760
  %45 = vmatpush.msra.mxu0 %v44
  %v46 = vand.u32 %v29, 4294901760
  %47 = vmatpush.msra.mxu0 %v46
  %v48 = vand.u32 %v28, 4294901760
  %49 = vmatpush.msra.mxu0 %v48
  %v50 = vand.u32 %v27, 4294901760
  %51 = vmatpush.msra.mxu0 %v50
  %v52 = vand.u32 %v26, 4294901760
  %53 = vmatpush.msra.mxu0 %v52
  %v54 = vand.u32 %v25, 4294901760
  %55 = vmatpush.msra.mxu0 %v54
  %v56 = vand.u32 %v24, 4294901760
  %57 = vmatpush.msra.mxu0 %v56
  %v58 = vand.u32 %v23, 4294901760
  %59 = vmatpush.msra.mxu0 %v58
  %v60 = vand.u32 %v22, 4294901760
  %61 = vmatpush.msra.mxu0 %v60
  %v62 = vand.u32 %v21, 4294901760
  %63 = vmatpush.msra.mxu0 %v62
  %v64 = vand.u32 %v20, 4294901760
  %65 = vmatpush.msra.mxu0 %v64
  %v66 = vand.u32 %v19, 4294901760
  %67 = vmatpush.msra.mxu0 %v66
  %v68 = vand.u32 %v18, 4294901760
  %69 = vmatpush.msra.mxu0 %v68
  %v70 = vand.u32 %v14, 4294901760
  %v71 = vsub.f32 %v14, %v70
  %v72 = vand.u32 %v71, 4294901760
  %v73 = vsub.f32 %v71, %v72
  %v74 = vand.u32 %v73, 4294901760
  %75 = vmatmul.f32.gmra.mxu0 %v74
  %v76 = vpop.f32.mrf.mxu0
  %v77 = vadd.f32 %v34, %v76
  %v78 = vand.u32 %v15, 4294901760
  %v79 = vsub.f32 %v15, %v78
  %v80 = vand.u32 %v79, 4294901760
  %v81 = vsub.f32 %v79, %v80
  %v82 = vand.u32 %v81, 4294901760
  %83 = vmatmul.f32.gmra.mxu0 %v82
  %v84 = vpop.f32.mrf.mxu0
  %v85 = vadd.f32 %v35, %v84
  %v86 = vand.u32 %v16, 4294901760
  %v87 = vsub.f32 %v16, %v86
  %v88 = vand.u32 %v87, 4294901760
  %v89 = vsub.f32 %v87, %v88
  %v90 = vand.u32 %v89, 4294901760
  %91 = vmatmul.f32.gmra.mxu0 %v90
  %v92 = vpop.f32.mrf.mxu0
  %v93 = vadd.f32 %v36, %v92
  %v94 = vand.u32 %v17, 4294901760
  %v95 = vsub.f32 %v17, %v94
  %v96 = vand.u32 %v95, 4294901760
  %v97 = vsub.f32 %v95, %v96
  %v98 = vand.u32 %v97, 4294901760
  %99 = vmatmul.f32.gmra.mxu0 %v98
  %v100 = vpop.f32.mrf.mxu0
  %v101 = vadd.f32 %v37, %v100
  %102 = vdwg.mxu0
  %v103 = vand.u32 %v33, 4294901760
  %v104 = vsub.f32 %v33, %v103
  %v105 = vand.u32 %v104, 4294901760
  %v106 = vsub.f32 %v104, %v105
  %v107 = vand.u32 %v106, 4294901760
  %108 = vmatpush.msra.mxu0 %v107
  %v109 = vand.u32 %v32, 4294901760
  %v110 = vsub.f32 %v32, %v109
  %v111 = vand.u32 %v110, 4294901760
  %v112 = vsub.f32 %v110, %v111
  %v113 = vand.u32 %v112, 4294901760
  %114 = vmatpush.msra.mxu0 %v113
  %v115 = vand.u32 %v31, 4294901760
  %v116 = vsub.f32 %v31, %v115
  %v117 = vand.u32 %v116, 4294901760
  %v118 = vsub.f32 %v116, %v117
  %v119 = vand.u32 %v118, 4294901760
  %120 = vmatpush.msra.mxu0 %v119
  %v121 = vand.u32 %v30, 4294901760
  %v122 = vsub.f32 %v30, %v121
  %v123 = vand.u32 %v122, 4294901760
  %v124 = vsub.f32 %v122, %v123
  %v125 = vand.u32 %v124, 4294901760
  %126 = vmatpush.msra.mxu0 %v125
  %v127 = vand.u32 %v29, 4294901760
  %v128 = vsub.f32 %v29, %v127
  %v129 = vand.u32 %v128, 4294901760
  %v130 = vsub.f32 %v128, %v129
  %v131 = vand.u32 %v130, 4294901760
  %132 = vmatpush.msra.mxu0 %v131
  %v133 = vand.u32 %v28, 4294901760
  %v134 = vsub.f32 %v28, %v133
  %v135 = vand.u32 %v134, 4294901760
  %v136 = vsub.f32 %v134, %v135
  %v137 = vand.u32 %v136, 4294901760
  %138 = vmatpush.msra.mxu0 %v137
  %v139 = vand.u32 %v27, 4294901760
  %v140 = vsub.f32 %v27, %v139
  %v141 = vand.u32 %v140, 4294901760
  %v142 = vsub.f32 %v140, %v141
  %v143 = vand.u32 %v142, 4294901760
  %144 = vmatpush.msra.mxu0 %v143
  %v145 = vand.u32 %v26, 4294901760
  %v146 = vsub.f32 %v26, %v145
  %v147 = vand.u32 %v146, 4294901760
  %v148 = vsub.f32 %v146, %v147
  %v149 = vand.u32 %v148, 4294901760
  %150 = vmatpush.msra.mxu0 %v149
  %v151 = vand.u32 %v25, 4294901760
  %v152 = vsub.f32 %v25, %v151
  %v153 = vand.u32 %v152, 4294901760
  %v154 = vsub.f32 %v152, %v153
  %v155 = vand.u32 %v154, 4294901760
  %156 = vmatpush.msra.mxu0 %v155
  %v157 = vand.u32 %v24, 4294901760
  %v158 = vsub.f32 %v24, %v157
  %v159 = vand.u32 %v158, 4294901760
  %v160 = vsub.f32 %v158, %v159
  %v161 = vand.u32 %v160, 4294901760
  %162 = vmatpush.msra.mxu0 %v161
  %v163 = vand.u32 %v23, 4294901760
  %v164 = vsub.f32 %v23, %v163
  %v165 = vand.u32 %v164, 4294901760
  %v166 = vsub.f32 %v164, %v165
  %v167 = vand.u32 %v166, 4294901760
  %168 = vmatpush.msra.mxu0 %v167
  %v169 = vand.u32 %v22, 4294901760
  %v170 = vsub.f32 %v22, %v169
  %v171 = vand.u32 %v170, 4294901760
  %v172 = vsub.f32 %v170, %v171
  %v173 = vand.u32 %v172, 4294901760
  %174 = vmatpush.msra.mxu0 %v173
  %v175 = vand.u32 %v21, 4294901760
  %v176 = vsub.f32 %v21, %v175
  %v177 = vand.u32 %v176, 4294901760
  %v178 = vsub.f32 %v176, %v177
  %v179 = vand.u32 %v178, 4294901760
  %180 = vmatpush.msra.mxu0 %v179
  %v181 = vand.u32 %v20, 4294901760
  %v182 = vsub.f32 %v20, %v181
  %v183 = vand.u32 %v182, 4294901760
  %v184 = vsub.f32 %v182, %v183
  %v185 = vand.u32 %v184, 4294901760
  %186 = vmatpush.msra.mxu0 %v185
  %v187 = vand.u32 %v19, 4294901760
  %v188 = vsub.f32 %v19, %v187
  %v189 = vand.u32 %v188, 4294901760
  %v190 = vsub.f32 %v188, %v189
  %v191 = vand.u32 %v190, 4294901760
  %192 = vmatpush.msra.mxu0 %v191
  %v193 = vand.u32 %v18, 4294901760
  %v194 = vsub.f32 %v18, %v193
  %v195 = vand.u32 %v194, 4294901760
  %v196 = vsub.f32 %v194, %v195
  %v197 = vand.u32 %v196, 4294901760
  %198 = vmatpush.msra.mxu0 %v197
  %v199 = vand.u32 %v14, 4294901760
  %200 = vmatmul.f32.gmra.mxu0 %v199
  %v201 = vpop.f32.mrf.mxu0
  %v202 = vadd.f32 %v77, %v201
  %v203 = vand.u32 %v15, 4294901760
  %204 = vmatmul.f32.gmra.mxu0 %v203
  %v205 = vpop.f32.mrf.mxu0
  %v206 = vadd.f32 %v85, %v205
  %v207 = vand.u32 %v16, 4294901760
  %208 = vmatmul.f32.gmra.mxu0 %v207
  %v209 = vpop.f32.mrf.mxu0
  %v210 = vadd.f32 %v93, %v209
  %v211 = vand.u32 %v17, 4294901760
  %212 = vmatmul.f32.gmra.mxu0 %v211
  %v213 = vpop.f32.mrf.mxu0
  %v214 = vadd.f32 %v101, %v213
  %215 = vdwg.mxu0
  %v216 = vand.u32 %v33, 4294901760
  %v217 = vsub.f32 %v33, %v216
  %218 = vmatpush.msra.mxu0 %v217
  %v219 = vand.u32 %v32, 4294901760
  %v220 = vsub.f32 %v32, %v219
  %221 = vmatpush.msra.mxu0 %v220
  %v222 = vand.u32 %v31, 4294901760
  %v223 = vsub.f32 %v31, %v222
  %224 = vmatpush.msra.mxu0 %v223
  %v225 = vand.u32 %v30, 4294901760
  %v226 = vsub.f32 %v30, %v225
  %227 = vmatpush.msra.mxu0 %v226
  %v228 = vand.u32 %v29, 4294901760
  %v229 = vsub.f32 %v29, %v228
  %230 = vmatpush.msra.mxu0 %v229
  %v231 = vand.u32 %v28, 4294901760
  %v232 = vsub.f32 %v28, %v231
  %233 = vmatpush.msra.mxu0 %v232
  %v234 = vand.u32 %v27, 4294901760
  %v235 = vsub.f32 %v27, %v234
  %236 = vmatpush.msra.mxu0 %v235
  %v237 = vand.u32 %v26, 4294901760
  %v238 = vsub.f32 %v26, %v237
  %239 = vmatpush.msra.mxu0 %v238
  %v240 = vand.u32 %v25, 4294901760
  %v241 = vsub.f32 %v25, %v240
  %242 = vmatpush.msra.mxu0 %v241
  %v243 = vand.u32 %v24, 4294901760
  %v244 = vsub.f32 %v24, %v243
  %245 = vmatpush.msra.mxu0 %v244
  %v246 = vand.u32 %v23, 4294901760
  %v247 = vsub.f32 %v23, %v246
  %248 = vmatpush.msra.mxu0 %v247
  %v249 = vand.u32 %v22, 4294901760
  %v250 = vsub.f32 %v22, %v249
  %251 = vmatpush.msra.mxu0 %v250
  %v252 = vand.u32 %v21, 4294901760
  %v253 = vsub.f32 %v21, %v252
  %254 = vmatpush.msra.mxu0 %v253
  %v255 = vand.u32 %v20, 4294901760
  %v256 = vsub.f32 %v20, %v255
  %257 = vmatpush.msra.mxu0 %v256
  %v258 = vand.u32 %v19, 4294901760
  %v259 = vsub.f32 %v19, %v258
  %260 = vmatpush.msra.mxu0 %v259
  %v261 = vand.u32 %v18, 4294901760
  %v262 = vsub.f32 %v18, %v261
  %263 = vmatpush.msra.mxu0 %v262
  %v264 = vand.u32 %v14, 4294901760
  %v265 = vsub.f32 %v14, %v264
  %266 = vmatmul.f32.gmra.mxu0 %v265
  %v267 = vpop.f32.mrf.mxu0
  %v268 = vadd.f32 %v202, %v267
  %v269 = vand.u32 %v15, 4294901760
  %v270 = vsub.f32 %v15, %v269
  %271 = vmatmul.f32.gmra.mxu0 %v270
  %v272 = vpop.f32.mrf.mxu0
  %v273 = vadd.f32 %v206, %v272
  %v274 = vand.u32 %v16, 4294901760
  %v275 = vsub.f32 %v16, %v274
  %276 = vmatmul.f32.gmra.mxu0 %v275
  %v277 = vpop.f32.mrf.mxu0
  %v278 = vadd.f32 %v210, %v277
  %v279 = vand.u32 %v17, 4294901760
  %v280 = vsub.f32 %v17, %v279
  %281 = vmatmul.f32.gmra.mxu0 %v280
  %v282 = vpop.f32.mrf.mxu0
  %v283 = vadd.f32 %v214, %v282
  %284 = vdwg.mxu0
  %v285 = vand.u32 %v33, 4294901760
  %286 = vmatpush.msra.mxu0 %v285
  %v287 = vand.u32 %v32, 4294901760
  %288 = vmatpush.msra.mxu0 %v287
  %v289 = vand.u32 %v31, 4294901760
  %290 = vmatpush.msra.mxu0 %v289
  %v291 = vand.u32 %v30, 4294901760
  %292 = vmatpush.msra.mxu0 %v291
  %v293 = vand.u32 %v29, 4294901760
  %294 = vmatpush.msra.mxu0 %v293
  %v295 = vand.u32 %v28, 4294901760
  %296 = vmatpush.msra.mxu0 %v295
  %v297 = vand.u32 %v27, 4294901760
  %298 = vmatpush.msra.mxu0 %v297
  %v299 = vand.u32 %v26, 4294901760
  %300 = vmatpush.msra.mxu0 %v299
  %v301 = vand.u32 %v25, 4294901760
  %302 = vmatpush.msra.mxu0 %v301
  %v303 = vand.u32 %v24, 4294901760
  %304 = vmatpush.msra.mxu0 %v303
  %v305 = vand.u32 %v23, 4294901760
  %306 = vmatpush.msra.mxu0 %v305
  %v307 = vand.u32 %v22, 4294901760
  %308 = vmatpush.msra.mxu0 %v307
  %v309 = vand.u32 %v21, 4294901760
  %310 = vmatpush.msra.mxu0 %v309
  %v311 = vand.u32 %v20, 4294901760
  %312 = vmatpush.msra.mxu0 %v311
  %v313 = vand.u32 %v19, 4294901760
  %314 = vmatpush.msra.mxu0 %v313
  %v315 = vand.u32 %v18, 4294901760
  %316 = vmatpush.msra.mxu0 %v315
  %v317 = vand.u32 %v14, 4294901760
  %v318 = vsub.f32 %v14, %v317
  %v319 = vand.u32 %v318, 4294901760
  %320 = vmatmul.f32.gmra.mxu0 %v319
  %v321 = vpop.f32.mrf.mxu0
  %v322 = vadd.f32 %v268, %v321
  %v323 = vand.u32 %v15, 4294901760
  %v324 = vsub.f32 %v15, %v323
  %v325 = vand.u32 %v324, 4294901760
  %326 = vmatmul.f32.gmra.mxu0 %v325
  %v327 = vpop.f32.mrf.mxu0
  %v328 = vadd.f32 %v273, %v327
  %v329 = vand.u32 %v16, 4294901760
  %v330 = vsub.f32 %v16, %v329
  %v331 = vand.u32 %v330, 4294901760
  %332 = vmatmul.f32.gmra.mxu0 %v331
  %v333 = vpop.f32.mrf.mxu0
  %v334 = vadd.f32 %v278, %v333
  %v335 = vand.u32 %v17, 4294901760
  %v336 = vsub.f32 %v17, %v335
  %v337 = vand.u32 %v336, 4294901760
  %338 = vmatmul.f32.gmra.mxu0 %v337
  %v339 = vpop.f32.mrf.mxu0
  %v340 = vadd.f32 %v283, %v339
  %341 = vdwg.mxu0
  %v342 = vand.u32 %v33, 4294901760
  %v343 = vsub.f32 %v33, %v342
  %v344 = vand.u32 %v343, 4294901760
  %345 = vmatpush.msra.mxu0 %v344
  %v346 = vand.u32 %v32, 4294901760
  %v347 = vsub.f32 %v32, %v346
  %v348 = vand.u32 %v347, 4294901760
  %349 = vmatpush.msra.mxu0 %v348
  %v350 = vand.u32 %v31, 4294901760
  %v351 = vsub.f32 %v31, %v350
  %v352 = vand.u32 %v351, 4294901760
  %353 = vmatpush.msra.mxu0 %v352
  %v354 = vand.u32 %v30, 4294901760
  %v355 = vsub.f32 %v30, %v354
  %v356 = vand.u32 %v355, 4294901760
  %357 = vmatpush.msra.mxu0 %v356
  %v358 = vand.u32 %v29, 4294901760
  %v359 = vsub.f32 %v29, %v358
  %v360 = vand.u32 %v359, 4294901760
  %361 = vmatpush.msra.mxu0 %v360
  %v362 = vand.u32 %v28, 4294901760
  %v363 = vsub.f32 %v28, %v362
  %v364 = vand.u32 %v363, 4294901760
  %365 = vmatpush.msra.mxu0 %v364
  %v366 = vand.u32 %v27, 4294901760
  %v367 = vsub.f32 %v27, %v366
  %v368 = vand.u32 %v367, 4294901760
  %369 = vmatpush.msra.mxu0 %v368
  %v370 = vand.u32 %v26, 4294901760
  %v371 = vsub.f32 %v26, %v370
  %v372 = vand.u32 %v371, 4294901760
  %373 = vmatpush.msra.mxu0 %v372
  %v374 = vand.u32 %v25, 4294901760
  %v375 = vsub.f32 %v25, %v374
  %v376 = vand.u32 %v375, 4294901760
  %377 = vmatpush.msra.mxu0 %v376
  %v378 = vand.u32 %v24, 4294901760
  %v379 = vsub.f32 %v24, %v378
  %v380 = vand.u32 %v379, 4294901760
  %381 = vmatpush.msra.mxu0 %v380
  %v382 = vand.u32 %v23, 4294901760
  %v383 = vsub.f32 %v23, %v382
  %v384 = vand.u32 %v383, 4294901760
  %385 = vmatpush.msra.mxu0 %v384
  %v386 = vand.u32 %v22, 4294901760
  %v387 = vsub.f32 %v22, %v386
  %v388 = vand.u32 %v387, 4294901760
  %389 = vmatpush.msra.mxu0 %v388
  %v390 = vand.u32 %v21, 4294901760
  %v391 = vsub.f32 %v21, %v390
  %v392 = vand.u32 %v391, 4294901760
  %393 = vmatpush.msra.mxu0 %v392
  %v394 = vand.u32 %v20, 4294901760
  %v395 = vsub.f32 %v20, %v394
  %v396 = vand.u32 %v395, 4294901760
  %397 = vmatpush.msra.mxu0 %v396
  %v398 = vand.u32 %v19, 4294901760
  %v399 = vsub.f32 %v19, %v398
  %v400 = vand.u32 %v399, 4294901760
  %401 = vmatpush.msra.mxu0 %v400
  %v402 = vand.u32 %v18, 4294901760
  %v403 = vsub.f32 %v18, %v402
  %v404 = vand.u32 %v403, 4294901760
  %405 = vmatpush.msra.mxu0 %v404
  %v406 = vand.u32 %v14, 4294901760
  %407 = vmatmul.f32.gmra.mxu0 %v406
  %v408 = vpop.f32.mrf.mxu0
  %v409 = vadd.f32 %v322, %v408
  %v410 = vand.u32 %v15, 4294901760
  %411 = vmatmul.f32.gmra.mxu0 %v410
  %v412 = vpop.f32.mrf.mxu0
  %v413 = vadd.f32 %v328, %v412
  %v414 = vand.u32 %v16, 4294901760
  %415 = vmatmul.f32.gmra.mxu0 %v414
  %v416 = vpop.f32.mrf.mxu0
  %v417 = vadd.f32 %v334, %v416
  %v418 = vand.u32 %v17, 4294901760
  %419 = vmatmul.f32.gmra.mxu0 %v418
  %v420 = vpop.f32.mrf.mxu0
  %v421 = vadd.f32 %v340, %v420
  %422 = vdwg.mxu0
  %v423 = vand.u32 %v33, 4294901760
  %424 = vmatpush.msra.mxu0 %v423
  %v425 = vand.u32 %v32, 4294901760
  %426 = vmatpush.msra.mxu0 %v425
  %v427 = vand.u32 %v31, 4294901760
  %428 = vmatpush.msra.mxu0 %v427
  %v429 = vand.u32 %v30, 4294901760
  %430 = vmatpush.msra.mxu0 %v429
  %v431 = vand.u32 %v29, 4294901760
  %432 = vmatpush.msra.mxu0 %v431
  %v433 = vand.u32 %v28, 4294901760
  %434 = vmatpush.msra.mxu0 %v433
  %v435 = vand.u32 %v27, 4294901760
  %436 = vmatpush.msra.mxu0 %v435
  %v437 = vand.u32 %v26, 4294901760
  %438 = vmatpush.msra.mxu0 %v437
  %v439 = vand.u32 %v25, 4294901760
  %440 = vmatpush.msra.mxu0 %v439
  %v441 = vand.u32 %v24, 4294901760
  %442 = vmatpush.msra.mxu0 %v441
  %v443 = vand.u32 %v23, 4294901760
  %444 = vmatpush.msra.mxu0 %v443
  %v445 = vand.u32 %v22, 4294901760
  %446 = vmatpush.msra.mxu0 %v445
  %v447 = vand.u32 %v21, 4294901760
  %448 = vmatpush.msra.mxu0 %v447
  %v449 = vand.u32 %v20, 4294901760
  %450 = vmatpush.msra.mxu0 %v449
  %v451 = vand.u32 %v19, 4294901760
  %452 = vmatpush.msra.mxu0 %v451
  %v453 = vand.u32 %v18, 4294901760
  %454 = vmatpush.msra.mxu0 %v453
  %v455 = vand.u32 %v14, 4294901760
  %456 = vmatmul.f32.gmra.mxu0 %v455
  %v457 = vpop.f32.mrf.mxu0
  %v458 = vadd.f32 %v409, %v457
  %v459 = vand.u32 %v15, 4294901760
  %460 = vmatmul.f32.gmra.mxu0 %v459
  %v461 = vpop.f32.mrf.mxu0
  %v462 = vadd.f32 %v413, %v461
  %v463 = vand.u32 %v16, 4294901760
  %464 = vmatmul.f32.gmra.mxu0 %v463
  %v465 = vpop.f32.mrf.mxu0
  %v466 = vadd.f32 %v417, %v465
  %v467 = vand.u32 %v17, 4294901760
  %468 = vmatmul.f32.gmra.mxu0 %v467
  %v469 = vpop.f32.mrf.mxu0
  %v470 = vadd.f32 %v421, %v469
  %471 = vdwg.mxu0
  %472 = vst [vmem:[%s3] sm:$0xff] %v458
  %473 = vst [vmem:[%s3 + $0x8] sm:$0xff] %v462
  %474 = vst [vmem:[%s3 + $0x10] sm:$0xff] %v466
  %475 = vst [vmem:[%s3 + $0x18] sm:$0xff] %v470
  // Predicated region
  $region14: #{patch_embedding_pallas.1} parent=0 // pred_check
    _
  $region15: #{patch_embedding_pallas.1} parent=0 // pred_check_branch
    %477 = sbr.rel (0) target = $region17
  $region16: #{patch_embedding_pallas.1} parent=0 // pred_region
    _
  $region17: #{patch_embedding_pallas.1} parent=0 // pred_fallthru
    _
  // Predicated region
  $region18: #{patch_embedding_pallas.1} parent=0 // pred_check
    _
  $region19: #{patch_embedding_pallas.1} parent=0 // pred_check_branch
    %479 = sbr.rel (0) target = $region21
  $region20: #{patch_embedding_pallas.1} parent=0 // pred_region
    _
  $region21: #{patch_embedding_pallas.1} parent=0 // pred_fallthru
    _

</llo_original>
